<compile_context>
chip_gen: v5e
topology: v5e:2x2
jax: 0.10.0
libtpu: 0.0.40
codegen_flags: <defaults>
</compile_context>

<pallas_src>
import math

import jax
import jax.numpy as jnp
from jax import lax
from jax.experimental import pallas as pl
from jax.experimental.pallas import tpu as pltpu

_MIB = 1024 * 1024
_MN_CANDIDATES = (2048, 1536, 1024, 768, 512, 384, 256, 128)


def _round_up(x, m):
    return ((x + m - 1) // m) * m


def _vmem_capacity_bytes():
    """Physical VMEM of the attached chip (64 MiB on v7x, 128 MiB on v5e/v6e)."""
    try:
        info = pltpu.get_tpu_info()
        cap = getattr(info, "vmem_capacity_bytes", None)
        if cap:
            return int(cap)
    except Exception:
        pass
    return 64 * _MIB  # conservative fallback (v7x per-TensorCore)


def _pick_k_tile(k_dim, tile_k):
    """Largest lane-aligned candidate that divides K exactly (the reduction
    axis must never be ragged); otherwise fall back to a single full-K block."""
    candidates = []
    if tile_k and (tile_k % 128 == 0 or tile_k == k_dim):
        candidates.append(tile_k)
    candidates += [2048, 1536, 1024, 768, 512, 384, 256, 128]
    for cand in candidates:
        if cand <= k_dim and k_dim % cand == 0:
            return cand
    return k_dim


def _footprint_bytes(tm, tn, tk, x_item, w_item, o_item, has_bias):
    """Double-buffered input/output tiles + resident f32 accumulator."""
    fp = 2 * (tm * tk * x_item + tn * tk * w_item)   # double-buffered X/W tiles
    fp += 2 * tm * tn * o_item                       # double-buffered output tile
    fp += tm * tn * 4                                # f32 accumulator scratch
    if has_bias:
        fp += 2 * 8 * max(tn, 128) * 4               # (1, tn) bias tile (padded)
    return fp


def _auto_mn_tiles(m, n, tk, budget, x_item, w_item, o_item, has_bias):
    """Largest square-ish M/N tiles whose working set fits the VMEM budget.
    tm is a multiple of 8 or the full M; tn is a multiple of 128 or the full N."""
    for c in _MN_CANDIDATES:
        tm = m if c >= m else c
        tn = n if c >= n else c
        if _footprint_bytes(tm, tn, tk, x_item, w_item, o_item, has_bias) <= budget:
            return tm, tn
    return min(m, 128), min(n, 128)


def _make_linear_kernel(has_bias, compute_dtype):
    def kernel(*refs):
        if has_bias:
            x_ref, w_ref, b_ref, o_ref, acc_ref = refs
        else:
            x_ref, w_ref, o_ref, acc_ref = refs
            b_ref = None
        k = pl.program_id(2)

        @pl.when(k == 0)
        def _init():
            acc_ref[...] = jnp.zeros_like(acc_ref)

        x = x_ref[...]
        w = w_ref[...]
        if compute_dtype is not None:
            x = x.astype(compute_dtype)
            w = w.astype(compute_dtype)

        # (tm, tk) . (tn, tk)^T -> (tm, tn): contract the last dims so the
        # weight stays in PyTorch (out, in) layout; Mosaic feeds this
        # transposed-RHS contraction to the MXU directly.
        # TODO(synk): confirm no per-step vxpose shows up in the bundle dump.
        acc_ref[...] += lax.dot_general(
            x, w,
            dimension_numbers=(((1,), (1,)), ((), ())),
            preferred_element_type=jnp.float32)

        @pl.when(k == pl.num_programs(2) - 1)
        def _finalize():
            acc = acc_ref[...]
            if has_bias:
                acc = acc + b_ref[...].astype(jnp.float32)
            o_ref[...] = acc.astype(o_ref.dtype)

    return kernel


def linear_forward(x, weight, bias=None, *, tile_m=None, tile_n=None,
                   tile_k=1024, compute_dtype=None):
    """Pallas equivalent of `X @ weight.T + bias`.

    x:      (..., in_features)
    weight: (out_features, in_features)   -- PyTorch convention (NOT transposed)
    bias:   (out_features,) or None
    compute_dtype: optional dtype (e.g. jnp.bfloat16) for the MXU inputs;
                   accumulation is always f32.
    """
    out_features, in_features = weight.shape
    assert x.shape[-1] == in_features

    lead_shape = x.shape[:-1]
    m = math.prod(lead_shape) if lead_shape else 1
    n = out_features
    x2d = x.reshape(m, in_features)

    # --- K tiling (must divide exactly so garbage never enters the acc). ---
    k_dim = in_features
    tk = _pick_k_tile(k_dim, tile_k)
    if tk == k_dim and k_dim > 2048:
        # Awkward large K (no aligned divisor): zero-pad the contraction axis
        # once (exact) instead of forcing a huge full-K resident block.
        k_pad = _round_up(k_dim, 512)
        x2d = jnp.pad(x2d, ((0, 0), (0, k_pad - k_dim)))
        weight = jnp.pad(weight, ((0, 0), (0, k_pad - k_dim)))
        k_dim = k_pad
        tk = _pick_k_tile(k_dim, tile_k)

    out_dtype = x.dtype
    x_item = x2d.dtype.itemsize
    w_item = weight.dtype.itemsize
    o_item = jnp.dtype(out_dtype).itemsize
    has_bias = bias is not None

    # --- Generation-aware M/N tiling under a VMEM budget. ---
    vmem_cap = _vmem_capacity_bytes()
    budget = int(0.45 * vmem_cap)
    tm_a, tn_a = _auto_mn_tiles(m, n, tk, budget, x_item, w_item, o_item, has_bias)
    if tile_m is None and tile_n is None:
        tm, tn = tm_a, tn_a
        # Megacore / 2-TC (v7x): make sure the parallel grid has >= 2 blocks.
        if pl.cdiv(m, tm) * pl.cdiv(n, tn) == 1 and m > 8:
            tm_half = _round_up(pl.cdiv(m, 2), 8)
            if tm_half < m:
                tm = tm_half
    else:
        tm = min(tile_m, m) if tile_m is not None else tm_a
        tn = min(tile_n, n) if tile_n is not None else tn_a

    grid_m = pl.cdiv(m, tm)
    grid_n = pl.cdiv(n, tn)
    grid_k = k_dim // tk  # exact by construction

    # Scheduler hint: X is streamed grid_n times, W grid_m times on this grid.
    x_bytes = x2d.size * x_item
    w_bytes = weight.size * w_item
    b_bytes = bias.size * bias.dtype.itemsize if has_bias else 0
    o_bytes = m * n * o_item
    cost = pl.CostEstimate(
        flops=2 * m * n * k_dim,
        transcendentals=0,
        bytes_accessed=grid_n * x_bytes + grid_m * w_bytes + grid_m * b_bytes + o_bytes)

    footprint = _footprint_bytes(tm, tn, tk, x_item, w_item, o_item, has_bias)
    vmem_limit = int(min(0.9 * vmem_cap, max(32 * _MIB, 1.5 * footprint)))

    compiler_params = pltpu.CompilerParams(
        dimension_semantics=("parallel", "parallel", "arbitrary"),
        vmem_limit_bytes=vmem_limit)

    in_specs = [
        pl.BlockSpec((tm, tk), lambda i, j, k: (i, k)),
        pl.BlockSpec((tn, tk), lambda i, j, k: (j, k)),
    ]
    args = [x2d, weight]
    if has_bias:
        in_specs.append(pl.BlockSpec((1, tn), lambda i, j, k: (0, j)))
        args.append(bias.reshape(1, n))

    out = pl.pallas_call(
        _make_linear_kernel(has_bias, compute_dtype),
        out_shape=jax.ShapeDtypeStruct((m, n), out_dtype),
        grid_spec=pltpu.PrefetchScalarGridSpec(
            num_scalar_prefetch=0,
            grid=(grid_m, grid_n, grid_k),
            in_specs=in_specs,
            out_specs=pl.BlockSpec((tm, tn), lambda i, j, k: (i, j)),
            scratch_shapes=[pltpu.VMEM((tm, tn), jnp.float32)]),
        compiler_params=compiler_params,
        cost_estimate=cost,
    )(*args)

    return out.reshape(*lead_shape, n)


def xavier_uniform(key, out_features, in_features, dtype=jnp.float32):
    # Matches torch.nn.init.xavier_uniform_ (gain=1.0)
    limit = math.sqrt(6.0 / (in_features + out_features))
    return jax.random.uniform(
        key, (out_features, in_features), dtype=dtype, minval=-limit, maxval=limit)


if __name__ == "__main__":
    key = jax.random.PRNGKey(0)
    k_x, k_w = jax.random.split(key)

    batch, seq, in_features, out_features = 2, 8, 32, 64

    x = jax.random.normal(k_x, (batch, seq, in_features), dtype=jnp.float32)
    weight = xavier_uniform(k_w, out_features, in_features)   # (out, in), PyTorch conv.
    bias = jnp.zeros((out_features,), dtype=jnp.float32)      # nn.init.zeros_

    y_ref = x @ weight.T + bias

    # bias=True path
    y = jax.block_until_ready(linear_forward(x, weight, bias))
    assert y.shape == (batch, seq, out_features)
    assert jnp.allclose(y, y_ref, atol=1e-5, rtol=1e-5), "mismatch vs reference (bias)"

    # bias=False path
    y_nb = jax.block_until_ready(linear_forward(x, weight, None))
    assert jnp.allclose(y_nb, x @ weight.T, atol=1e-5, rtol=1e-5), "mismatch (no bias)"

    # optional bf16 MXU-input path (f32 accumulation)
    y_bf = jax.block_until_ready(
        linear_forward(x, weight, bias, compute_dtype=jnp.bfloat16))
    assert jnp.allclose(y_bf, y_ref, atol=5e-2, rtol=5e-2), "mismatch (bf16 compute)"

    print("KERNEL_OK")
</pallas_src>

<mosaic_0001>
module attributes {stable_mosaic.version = 11 : i64} {
  func.func @kernel(%arg0: i32, %arg1: i32, %arg2: i32, %arg3: memref<8x32xf32, #tpu.memory_space<vmem>>, %arg4: memref<64x32xf32, #tpu.memory_space<vmem>>, %arg5: memref<1x64xf32, #tpu.memory_space<vmem>>, %arg6: memref<8x64xf32, #tpu.memory_space<vmem>>, %arg7: memref<8x64xf32, #tpu.memory_space<vmem>>) attributes {dimension_semantics = [#tpu.dimension_semantics<parallel>, #tpu.dimension_semantics<parallel>, #tpu.dimension_semantics<arbitrary>], iteration_bounds = array<i64: 2, 1, 1>, scalar_prefetch = 0 : i64, scratch_operands = 1 : i64, tpu.core_type = #tpu.core_type<tc>, window_params = [{transform_indices = @transform_0, window_bounds = array<i64: 8, 32>}, {transform_indices = @transform_1, window_bounds = array<i64: 64, 32>}, {transform_indices = @transform_2, window_bounds = array<i64: 1, 64>}, {transform_indices = @transform_3, window_bounds = array<i64: 8, 64>}]} {
    %c0_i32 = arith.constant 0 : i32
    %0 = arith.cmpi eq, %arg2, %c0_i32 : i32
    %1 = arith.extui %0 : i1 to i32
    %c0_i32_0 = arith.constant 0 : i32
    %2 = arith.cmpi ne, %1, %c0_i32_0 : i32
    scf.if %2 {
      %cst_10 = arith.constant 0.000000e+00 : f32
      %12 = vector.broadcast %cst_10 : f32 to vector<8x64xf32>
      %c0_11 = arith.constant 0 : index
      %c0_12 = arith.constant 0 : index
      %13 = vector.load %arg7[%c0_11, %c0_12] : memref<8x64xf32, #tpu.memory_space<vmem>>, vector<8x64xf32>
      tpu.vector_store %arg7[%c0_11, %c0_12], %12 {strides = array<i32>} : memref<8x64xf32, #tpu.memory_space<vmem>>, vector<8x64xf32>,
    } else {
    }
    %c0 = arith.constant 0 : index
    %c0_1 = arith.constant 0 : index
    %3 = vector.load %arg3[%c0, %c0_1] : memref<8x32xf32, #tpu.memory_space<vmem>>, vector<8x32xf32>
    %c0_2 = arith.constant 0 : index
    %c0_3 = arith.constant 0 : index
    %4 = vector.load %arg4[%c0_2, %c0_3] : memref<64x32xf32, #tpu.memory_space<vmem>>, vector<64x32xf32>
    %c0_4 = arith.constant 0 : index
    %c0_5 = arith.constant 0 : index
    %5 = vector.load %arg7[%c0_4, %c0_5] : memref<8x64xf32, #tpu.memory_space<vmem>>, vector<8x64xf32>
    %cst = arith.constant dense<0.000000e+00> : vector<8x64xf32>
    %6 = tpu.matmul %3, %4, %cst {dimension_numbers = #tpu.dot_dimension_numbers<[1], [1], [0], [0], [0, 0, 1, 0], [], []>} : vector<8x32xf32>, vector<64x32xf32>, vector<8x64xf32> -> vector<8x64xf32>
    %7 = arith.addf %5, %6 : vector<8x64xf32>
    %c0_6 = arith.constant 0 : index
    %c0_7 = arith.constant 0 : index
    %8 = vector.load %arg7[%c0_6, %c0_7] : memref<8x64xf32, #tpu.memory_space<vmem>>, vector<8x64xf32>
    tpu.vector_store %arg7[%c0_6, %c0_7], %7 {strides = array<i32>} : memref<8x64xf32, #tpu.memory_space<vmem>>, vector<8x64xf32>,
    %c0_i32_8 = arith.constant 0 : i32
    %9 = arith.cmpi eq, %arg2, %c0_i32_8 : i32
    %10 = arith.extui %9 : i1 to i32
    %c0_i32_9 = arith.constant 0 : i32
    %11 = arith.cmpi ne, %10, %c0_i32_9 : i32
    scf.if %11 {
      %c0_10 = arith.constant 0 : index
      %c0_11 = arith.constant 0 : index
      %12 = vector.load %arg7[%c0_10, %c0_11] : memref<8x64xf32, #tpu.memory_space<vmem>>, vector<8x64xf32>
      %c0_12 = arith.constant 0 : index
      %c0_13 = arith.constant 0 : index
      %13 = vector.load %arg5[%c0_12, %c0_13] : memref<1x64xf32, #tpu.memory_space<vmem>>, vector<1x64xf32>
      %14 = vector.broadcast %13 : vector<1x64xf32> to vector<8x64xf32>
      %15 = arith.addf %12, %14 : vector<8x64xf32>
      %c0_14 = arith.constant 0 : index
      %c0_15 = arith.constant 0 : index
      %16 = vector.load %arg6[%c0_14, %c0_15] : memref<8x64xf32, #tpu.memory_space<vmem>>, vector<8x64xf32>
      tpu.vector_store %arg6[%c0_14, %c0_15], %15 {strides = array<i32>} : memref<8x64xf32, #tpu.memory_space<vmem>>, vector<8x64xf32>,
    } else {
    }
    return
  }
  func.func @transform_0(%arg0: i32, %arg1: i32, %arg2: i32) -> (i32, i32) {
    %c0_i32 = arith.constant 0 : i32
    return %arg0, %arg2 : i32, i32
  }
  func.func @transform_1(%arg0: i32, %arg1: i32, %arg2: i32) -> (i32, i32) {
    %c0_i32 = arith.constant 0 : i32
    return %arg1, %arg2 : i32, i32
  }
  func.func @transform_2(%arg0: i32, %arg1: i32, %arg2: i32) -> (i32, i32) {
    %c0_i32 = arith.constant 0 : i32
    %c0_i32_0 = arith.constant 0 : i32
    return %c0_i32, %arg1 : i32, i32
  }
  func.func @transform_3(%arg0: i32, %arg1: i32, %arg2: i32) -> (i32, i32) {
    %c0_i32 = arith.constant 0 : i32
    return %arg0, %arg1 : i32, i32
  }
}

</mosaic_0001>

<llo_original>
// kernel: tpu_custom_call.1
$region0: #{tpu_custom_call.1}
  #allocation0 [shape = 'u32[]', space=smem, size = 0x4, offset = 0x4, fixed_abs, tag = 'smem constant byte address 0x4 - core index']
  #allocation1 [shape = 'u32[72,128]{1,0:T(1,128)}', space=vmem, size = 0x9000, scoped, tag = 'internal scratch']
  #allocation2 [shape = 'f32[8,64]{1,0:T(8,128)}', space=vmem, size = 0x1000, scoped, tag = 'scratch operand']
  %s0 = inlined_call_operand.vmem [shape: f32[16,32], index: 0, kind: input, shape index: {}]
  %s1 = inlined_call_operand.vmem [shape: f32[64,32], index: 1, kind: input, shape index: {}]
  %s2 = inlined_call_operand.vmem [shape: f32[1,64], index: 2, kind: input, shape index: {}]
  %s3 = inlined_call_operand.hbm [shape: f32[16,64], index: 3, kind: output, shape index: {}]
  %s4 = sld [smem:[#allocation0]]
  $region53: #{tpu_custom_call.1} parent=0
    _
  %s6 = ssub.s32 1, %s4
  %s7 = scalar_select 0, %s6, %s4
  $region1: #{tpu_custom_call.1} parent=0
    #allocation3 [shape = 'u8[8192]{0}', space=vmem, size = 0x2000, scoped, tag = 'output window, operand 0']
    #allocation4 [shape = 's32[2]{0}', space=sflag, size = 0x8, scoped, tag = 'scoped memory for tpu_custom_call.1']
    %8 = vsyncpa [#allocation4], 0
    %s9 = scalar_lea.sflag [#allocation4], 1
    %10 = vsyncpa %s9, 0
    loop: start=0, step=1, limit=4
    $region2: #{tpu_custom_call.1} parent=1 // loop_pre_header
      _
    $region3: #{tpu_custom_call.1} parent=1 // loop_header
      %s12 = sphi 0, %s16
      %p13 = scmp.ge.s32.totalorder %s12, 4
      %s19 = sphi 0, %s38
      %s20 = sphi 0, %s34
      %s21 = sphi 0, %s30
      %s22 = sphi 0, %s19
      %s23 = sphi 0, %s20
      %s24 = sphi 0, %s21
      %s25 = sphi 0, %s22
      %s26 = sphi 0, %s23
      %s27 = sphi 0, %s24
      %s43 = sphi 0, %s45
      %s46 = sphi 0, %s43
      %s47 = sphi 0, %s46
      %s63 = sphi 0, %s47
      %s71 = sphi 0, %s73
      %s74 = sphi 0, %s71
      %s75 = sphi 0, %s74
      %s91 = sphi 0, %s75
      %s97 = sphi 0, %s99
      %s100 = sphi 0, %s97
      %s101 = sphi 0, %s100
      %s117 = sphi 0, %s101
      %s125 = sphi 0, %s127
      %s128 = sphi 0, %s125
      %s129 = sphi 0, %s128
      %s145 = sphi 0, %s129
    $region4: #{tpu_custom_call.1} parent=1 // loop_header_branch
      %15 = sbr.rel (%p13) target = $region8
    $region5: #{tpu_custom_call.1} parent=1 // loop_body
      %s17 = ssub.s32 %s12, 1
      %s18 = ssub.s32 %s12, 2
      %s28 = sadd.s32 1, %s21
      %p29 = scmp.ge.s32.totalorder %s28, 1
      %s30 = scalar_select %p29, 0, %s28
      %s31 = sadd.s32 1, %s20
      %s32 = scalar_select %p29, %s31, %s20
      %p33 = scmp.ge.s32.totalorder %s32, 1
      %s34 = scalar_select %p33, 0, %s32
      %s35 = sadd.s32 1, %s19
      %s36 = scalar_select %p33, %s35, %s19
      %p37 = scmp.ge.s32.totalorder %s36, 2
      %s38 = scalar_select %p37, 0, %s36
      %s39 = ssub.s32 %s19, %s38
      %s40 = ssub.s32 %s21, %s30
      %s41 = sor.u32 %s39, %s40
      %p42 = scmp.eq.s32.totalorder %s41, 0
      %s44 = sadd.s32 %s43, 1
      %s45 = scalar_select %p42, %s43, %s44
      %p48 = pneg %p42
      %p49 = scmp.eq.s32.totalorder %s12, 1
      %p50 = por %p48, %p49
      %p51 = scmp.ne.s32.totalorder %s43, %s46
      %p52 = scmp.eq.s32.totalorder %s12, 0
      %p53 = por %p51, %p52
      %p54 = scmp.ne.s32.totalorder %s43, %s46
      %p55 = scmp.eq.s32.totalorder %s17, 1
      %p56 = por %p54, %p55
      %p57 = scmp.ne.s32.totalorder %s46, %s47
      %p58 = scmp.eq.s32.totalorder %s17, 0
      %p59 = por %p57, %p58
      %p60 = scmp.ne.s32.totalorder %s46, %s47
      %p61 = scmp.eq.s32.totalorder %s18, 1
      %p62 = por %p60, %p61
      %p64 = scmp.ne.s32.totalorder %s47, %s63
      %p65 = scmp.eq.s32.totalorder %s18, 0
      %p66 = por %p64, %p65
      %s67 = ssub.s32 %s20, %s34
      %s68 = ssub.s32 %s21, %s30
      %s69 = sor.u32 %s67, %s68
      %p70 = scmp.eq.s32.totalorder %s69, 0
      %s72 = sadd.s32 %s71, 1
      %s73 = scalar_select %p70, %s71, %s72
      %p76 = pneg %p70
      %p77 = scmp.eq.s32.totalorder %s12, 1
      %p78 = por %p76, %p77
      %p79 = scmp.ne.s32.totalorder %s71, %s74
      %p80 = scmp.eq.s32.totalorder %s12, 0
      %p81 = por %p79, %p80
      %p82 = scmp.ne.s32.totalorder %s71, %s74
      %p83 = scmp.eq.s32.totalorder %s17, 1
      %p84 = por %p82, %p83
      %p85 = scmp.ne.s32.totalorder %s74, %s75
      %p86 = scmp.eq.s32.totalorder %s17, 0
      %p87 = por %p85, %p86
      %p88 = scmp.ne.s32.totalorder %s74, %s75
      %p89 = scmp.eq.s32.totalorder %s18, 1
      %p90 = por %p88, %p89
      %p92 = scmp.ne.s32.totalorder %s75, %s91
      %p93 = scmp.eq.s32.totalorder %s18, 0
      %p94 = por %p92, %p93
      %s95 = ssub.s32 %s20, %s34
      %p96 = scmp.eq.s32.totalorder %s95, 0
      %s98 = sadd.s32 %s97, 1
      %s99 = scalar_select %p96, %s97, %s98
      %p102 = pneg %p96
      %p103 = scmp.eq.s32.totalorder %s12, 1
      %p104 = por %p102, %p103
      %p105 = scmp.ne.s32.totalorder %s97, %s100
      %p106 = scmp.eq.s32.totalorder %s12, 0
      %p107 = por %p105, %p106
      %p108 = scmp.ne.s32.totalorder %s97, %s100
      %p109 = scmp.eq.s32.totalorder %s17, 1
      %p110 = por %p108, %p109
      %p111 = scmp.ne.s32.totalorder %s100, %s101
      %p112 = scmp.eq.s32.totalorder %s17, 0
      %p113 = por %p111, %p112
      %p114 = scmp.ne.s32.totalorder %s100, %s101
      %p115 = scmp.eq.s32.totalorder %s18, 1
      %p116 = por %p114, %p115
      %p118 = scmp.ne.s32.totalorder %s101, %s117
      %p119 = scmp.eq.s32.totalorder %s18, 0
      %p120 = por %p118, %p119
      %s121 = ssub.s32 %s19, %s38
      %s122 = ssub.s32 %s20, %s34
      %s123 = sor.u32 %s121, %s122
      %p124 = scmp.eq.s32.totalorder %s123, 0
      %s126 = sadd.s32 %s125, 1
      %s127 = scalar_select %p124, %s125, %s126
      %p130 = pneg %p124
      %p131 = scmp.eq.s32.totalorder %s12, 1
      %p132 = por %p130, %p131
      %p133 = scmp.ne.s32.totalorder %s125, %s128
      %p134 = scmp.eq.s32.totalorder %s12, 0
      %p135 = por %p133, %p134
      %p136 = scmp.ne.s32.totalorder %s125, %s128
      %p137 = scmp.eq.s32.totalorder %s17, 1
      %p138 = por %p136, %p137
      %p139 = scmp.ne.s32.totalorder %s128, %s129
      %p140 = scmp.eq.s32.totalorder %s17, 0
      %p141 = por %p139, %p140
      %p142 = scmp.ne.s32.totalorder %s128, %s129
      %p143 = scmp.eq.s32.totalorder %s18, 1
      %p144 = por %p142, %p143
      %p146 = scmp.ne.s32.totalorder %s129, %s145
      %p147 = scmp.eq.s32.totalorder %s18, 0
      %p148 = por %p146, %p147
      %p149 = scmp.le.s32.totalorder 1, %s12
      %p150 = scmp.lt.s32.totalorder %s12, 3
      %p151 = pnand %p149, %p150
      %p152 = pneg %p151
      // Predicated region
      $region9: #{tpu_custom_call.1} parent=5 // pred_check
        _
      $region10: #{tpu_custom_call.1} parent=5 // pred_check_branch
        %154 = sbr.rel (%p151) target = $region12
      $region11: #{tpu_custom_call.1} parent=5 // pred_region
        %s155 = ssub.s32 %s12, 1
        // Predicated region
        $region13: #{tpu_custom_call.1} parent=11 // pred_check
          %p156 = pneg %p87
        $region14: #{tpu_custom_call.1} parent=11 // pred_check_branch
          %158 = sbr.rel (%p156) target = $region16
        $region15: #{tpu_custom_call.1} parent=11 // pred_region
          %s159 = smul.u32 8, %s23
          %p160 = scmp.lt.s32.totalorder %s159, 7
          %s161 = scalar_select %p160, %s159, 7
          %p162 = scmp.lt.s32.totalorder %s24, 0
          %s163 = scalar_select %p162, %s24, 0
          %s164 = sadd.s32 %s163, %s161
          %s165 = smul.addr %s164, 8
          %s166 = scalar_lea.vmem %s1, %s165
          %s167 = smul.u32 8, %s23
        $region16: #{tpu_custom_call.1} parent=11 // pred_fallthru
          _
        // Predicated region
        $region17: #{tpu_custom_call.1} parent=11 // pred_check
          %p168 = pneg %p113
        $region18: #{tpu_custom_call.1} parent=11 // pred_check_branch
          %170 = sbr.rel (%p168) target = $region20
        $region19: #{tpu_custom_call.1} parent=11 // pred_region
          %p171 = scmp.lt.s32.totalorder %s23, 0
          %s172 = scalar_select %p171, %s23, 0
          %s173 = scalar_lea.vmem %s2, %s172
        $region20: #{tpu_custom_call.1} parent=11 // pred_fallthru
          _
      $region12: #{tpu_custom_call.1} parent=5 // pred_fallthru
        _
      %p174 = scmp.lt.s32.totalorder %s12, 2
      // Predicated region
      $region21: #{tpu_custom_call.1} parent=5 // pred_check
        %p175 = pneg %p174
      $region22: #{tpu_custom_call.1} parent=5 // pred_check_branch
        %177 = sbr.rel (%p175) target = $region24
      $region23: #{tpu_custom_call.1} parent=5 // pred_region
        // Predicated region
        $region25: #{tpu_custom_call.1} parent=23 // pred_check
          %p178 = pneg %p53
        $region26: #{tpu_custom_call.1} parent=23 // pred_check_branch
          %180 = sbr.rel (%p178) target = $region28
        $region27: #{tpu_custom_call.1} parent=23 // pred_region
          %p181 = scmp.lt.s32.totalorder %s19, 1
          %s182 = scalar_select %p181, %s19, 1
          %p183 = scmp.lt.s32.totalorder %s21, 0
          %s184 = scalar_select %p183, %s21, 0
          %s185 = sadd.s32 %s184, %s182
          %s186 = smul.addr %s185, 8
          %s187 = scalar_lea.vmem %s0, %s186
        $region28: #{tpu_custom_call.1} parent=23 // pred_fallthru
          _
      $region24: #{tpu_custom_call.1} parent=5 // pred_fallthru
        _
      %p188 = scmp.le.s32.totalorder 1, %s12
      %p189 = scmp.lt.s32.totalorder %s12, 3
      %p190 = pnand %p188, %p189
      %p191 = pneg %p190
      // Predicated region
      $region29: #{tpu_custom_call.1} parent=5 // pred_check
        _
      $region30: #{tpu_custom_call.1} parent=5 // pred_check_branch
        %193 = sbr.rel (%p190) target = $region32
      $region31: #{tpu_custom_call.1} parent=5 // pred_region
        %s194 = ssub.s32 %s12, 1
        %p195 = scmp.lt.s32.totalorder %s22, 1
        %s196 = scalar_select %p195, %s22, 1
        %p197 = scmp.lt.s32.totalorder %s24, 0
        %s198 = scalar_select %p197, %s24, 0
        %s199 = sadd.s32 %s198, %s196
        %s200 = smul.addr %s199, 8
        %s201 = scalar_lea.vmem %s0, %s200
        %p202 = pneg %p59
        %p203 = pneg %p56
        %s204 = smul.u32 8, %s23
        %p205 = scmp.lt.s32.totalorder %s204, 7
        %s206 = scalar_select %p205, %s204, 7
        %p207 = scmp.lt.s32.totalorder %s24, 0
        %s208 = scalar_select %p207, %s24, 0
        %s209 = sadd.s32 %s208, %s206
        %s210 = smul.addr %s209, 8
        %s211 = scalar_lea.vmem %s1, %s210
        %p212 = pneg %p87
        %p213 = pneg %p84
        %p214 = scmp.lt.s32.totalorder %s23, 0
        %s215 = scalar_select %p214, %s23, 0
        %s216 = scalar_lea.vmem %s2, %s215
        %p217 = pneg %p113
        %p218 = pneg %p110
        %p219 = pneg %p141
        %p220 = pneg %p138
        %s221 = sand.u32 %s128, 1
        %s222 = scalar_lea.sflag [#allocation4], %s221
        %s223 = sand.u32 %s128, 1
        %s224 = smul.addr %s223, 8
        %s225 = scalar_lea.vmem [#allocation3], %s224
        %p226 = scmp.lt.s32.totalorder %s22, 1
        %s227 = scalar_select %p226, %s22, 1
        %p228 = scmp.lt.s32.totalorder %s24, 0
        %s229 = scalar_select %p228, %s24, 0
        %s230 = sadd.s32 %s229, %s227
        %s231 = smul.addr %s230, 8
        %s232 = scalar_lea.vmem %s0, %s231
        %s233 = smul.u32 8, %s23
        %p234 = scmp.lt.s32.totalorder %s233, 7
        %s235 = scalar_select %p234, %s233, 7
        %p236 = scmp.lt.s32.totalorder %s24, 0
        %s237 = scalar_select %p236, %s24, 0
        %s238 = sadd.s32 %s237, %s235
        %s239 = smul.addr %s238, 8
        %s240 = scalar_lea.vmem %s1, %s239
        %s241 = smul.u32 8, %s23
        %p242 = scmp.lt.s32.totalorder %s23, 0
        %s243 = scalar_select %p242, %s23, 0
        %s244 = scalar_lea.vmem %s2, %s243
        %p245 = scmp.eq.s32.totalorder %s24, 0
        // Predicated region
        $region33: #{tpu_custom_call.1} parent=31 // pred_check
          %p246 = pneg %p245
        $region34: #{tpu_custom_call.1} parent=31 // pred_check_branch
          %248 = sbr.rel (%p246) target = $region36
        $region35: #{tpu_custom_call.1} parent=31 // pred_region
          %vm249 = vcmask 523264
          %250 = vst.msk [vmem:[#allocation2] sm:$0xff] %vm249, 0.0
        $region36: #{tpu_custom_call.1} parent=31 // pred_fallthru
          _
        %v251 = vld [vmem:[%s232] sm:$0xff]
        %v252 = vld [vmem:[%s240] sm:$0xff]
        %v253 = vld [vmem:[%s240 + $0x8] sm:$0xff]
        %v254 = vld [vmem:[%s240 + $0x10] sm:$0xff]
        %v255 = vld [vmem:[%s240 + $0x18] sm:$0xff]
        %v256 = vld [vmem:[%s240 + $0x20] sm:$0xff]
        %v257 = vld [vmem:[%s240 + $0x28] sm:$0xff]
        %v258 = vld [vmem:[%s240 + $0x30] sm:$0xff]
        %v259 = vld [vmem:[%s240 + $0x38] sm:$0xff]
        %v260 = vld [vmem:[#allocation2] sm:$0xff]
        %vm261 = vcmask 261120
        %v263 = vsel %vm261, %v251, 0
        %v266 = vsel %vm261, %v252, 0
        %v269 = vsel %vm261, %v253, 0
        %v272 = vsel %vm261, %v254, 0
        %v275 = vsel %vm261, %v255, 0
        %v278 = vsel %vm261, %v256, 0
        %v281 = vsel %vm261, %v257, 0
        %v284 = vsel %vm261, %v258, 0
        %v287 = vsel %vm261, %v259, 0
        %289 = vmatpush.xpose.msra.mxu0 0.0
        %290 = vmatpush.xpose.msra.mxu0 0.0
        %291 = vmatpush.xpose.msra.mxu0 0.0
        %292 = vmatpush.xpose.msra.mxu0 0.0
        %293 = vmatpush.xpose.msra.mxu0 0.0
        %294 = vmatpush.xpose.msra.mxu0 0.0
        %295 = vmatpush.xpose.msra.mxu0 0.0
        %296 = vmatpush.xpose.msra.mxu0 0.0
        %297 = vmatpush.xpose.msra.mxu0 %v287
        %298 = vmatpush.xpose.msra.mxu0 %v284
        %299 = vmatpush.xpose.msra.mxu0 %v281
        %300 = vmatpush.xpose.msra.mxu0 %v278
        %301 = vmatpush.xpose.msra.mxu0 %v275
        %302 = vmatpush.xpose.msra.mxu0 %v272
        %303 = vmatpush.xpose.msra.mxu0 %v269
        %304 = vmatpush.xpose.msra.mxu0 %v266
        %305 = vmatmul.f32.gmra.mxu0 %v263
        %v306 = vpop.f32.mrf.mxu0
        %v307 = vadd.f32 0.0, %v306
        %308 = vdwg.mxu0
        %v309 = vadd.f32 %v260, %v307
        %vm310 = vcmask 523264
        %311 = vst.msk [vmem:[#allocation2] sm:$0xff] %vm310, %v309
        // Predicated region
        $region37: #{tpu_custom_call.1} parent=31 // pred_check
          %p312 = pneg %p245
        $region38: #{tpu_custom_call.1} parent=31 // pred_check_branch
          %314 = sbr.rel (%p312) target = $region40
        $region39: #{tpu_custom_call.1} parent=31 // pred_region
          %v315 = vld [vmem:[#allocation2] sm:$0xff]
          %v316 = vld [vmem:[%s244] sm:$0x1]
          %v318 = vperm.slane %v316, 0
          %v320 = vadd.f32 %v315, %v318
          %321 = vst.msk [vmem:[%s225] sm:$0xff] %vm310, %v320
        $region40: #{tpu_custom_call.1} parent=31 // pred_fallthru
          _
        %s322 = sand.u32 %s128, 1
        %s323 = scalar_lea.sflag [#allocation4], %s322
        %s324 = sand.u32 %s128, 1
        %s325 = smul.addr %s324, 8
        %s326 = scalar_lea.vmem [#allocation3], %s325
        // Predicated region
        $region41: #{tpu_custom_call.1} parent=31 // pred_check
          %p327 = pneg %p138
        $region42: #{tpu_custom_call.1} parent=31 // pred_check_branch
          %329 = sbr.rel (%p327) target = $region44
        $region43: #{tpu_custom_call.1} parent=31 // pred_region
          %331 = vsyncadd %s323, 0
          %s332 = sadd.s32 %s23, %s22
          %s333 = smul.addr %s332, 8
          %s334 = scalar_lea.hbm %s3, %s333
          %s336 = sshll.u32 %s326, 4
          %s337 = int_to_ptr.vmem [resolvable:$true] %s336
          %s338 = sshll.u32 %s334, 4
          %s339 = int_to_ptr.hbm [resolvable:$true] %s338
          %341 = dma.vmem_to_hbm [thread:$0]  %s337, 128, %s339, %s323
        $region44: #{tpu_custom_call.1} parent=31 // pred_fallthru
          _
      $region32: #{tpu_custom_call.1} parent=5 // pred_fallthru
        _
      %p342 = scmp.le.s32.totalorder 2, %s12
      // Predicated region
      $region45: #{tpu_custom_call.1} parent=5 // pred_check
        %p343 = pneg %p342
      $region46: #{tpu_custom_call.1} parent=5 // pred_check_branch
        %345 = sbr.rel (%p343) target = $region48
      $region47: #{tpu_custom_call.1} parent=5 // pred_region
        %s346 = ssub.s32 %s12, 2
        // Predicated region
        $region49: #{tpu_custom_call.1} parent=47 // pred_check
          %p347 = pneg %p144
        $region50: #{tpu_custom_call.1} parent=47 // pred_check_branch
          %349 = sbr.rel (%p347) target = $region52
        $region51: #{tpu_custom_call.1} parent=47 // pred_region
          %s350 = sand.u32 %s129, 1
          %s351 = scalar_lea.sflag [#allocation4], %s350
          %s352 = sand.u32 %s129, 1
          %s353 = smul.addr %s352, 8
          %s354 = scalar_lea.vmem [#allocation3], %s353
          %356 = dma.done %s351, 128
        $region52: #{tpu_custom_call.1} parent=47 // pred_fallthru
          _
      $region48: #{tpu_custom_call.1} parent=5 // pred_fallthru
        _
    $region6: #{tpu_custom_call.1} parent=1 // loop_footer
      %s16 = sadd.s32 1, %s12
    $region7: #{tpu_custom_call.1} parent=1 // loop_footer_branch
      %11 = sbr.rel target = $region3
    $region8: #{tpu_custom_call.1} parent=1 // loop_exit
      _
    %357 = vsyncpa [#allocation4], 1
    %s358 = scalar_lea.sflag [#allocation4], 1
    %359 = vsyncpa %s358, 1

</llo_original>
